<compile_context>
chip_gen: v6e
topology: v6e:2x2x1
jax: 0.10.0
libtpu: 0.0.40
codegen_flags: <defaults>
</compile_context>

<pallas_src>
import functools

import jax
import jax.numpy as jnp
from jax.experimental import pallas as pl
from jax.experimental.pallas import tpu as pltpu


def _round_up(x, m):
    return ((x + m - 1) // m) * m


_PARAM_ORDER = ("w1", "w2", "w3", "w4", "wfT", "b1", "b2", "b3", "b4", "bfT")


def pack_ca3_params(folded):
    """Pack the 10 tiny (folded) parameter arrays into one lane-padded f32 slab.

    Collapses 10 per-launch DMA descriptors / double-buffered VMEM allocations into
    one. Returns (slab, layout) where layout[name] = (row_offset, (rows, cols));
    row offsets are multiples of 8 so in-kernel static slices stay sublane-aligned.
    """
    layout = {}
    row = 0
    for name in _PARAM_ORDER:
        a = folded[name]
        assert a.ndim == 2 and a.shape[1] <= 128, (name, a.shape)
        layout[name] = (row, tuple(int(d) for d in a.shape))
        row += _round_up(a.shape[0], 8)
    slab = jnp.zeros((_round_up(row, 8), 128), jnp.float32)
    for name in _PARAM_ORDER:
        r0, (r, c) = layout[name]
        slab = slab.at[r0:r0 + r, :c].set(folded[name].astype(jnp.float32))
    return slab, layout


def ca3_kernel(x_beta_ref, xfT_ref, slab_ref, out_ref, beta_scratch, *,
               layout, gemm_dtype):
    j = pl.program_id(1)

    def param(name):
        r0, (r, c) = layout[name]
        return slab_ref[r0:r0 + r, 0:c]      # static slice of the packed slab

    # --- beta network: 4 fused Linear(+folded-BN)+ReLU layers, computed once per
    #     row tile and cached in VMEM scratch for all column tiles.
    # NOTE: the cache is only correct because the j axis is innermost and
    # "arbitrary" (sequential, starting at j == 0 on the core owning this row
    # tile).  Never make the j axis core-parallel or reorder the grid.
    # The intermediate activations are lane-sparse ((tm,32)/(tm,16)/(tm,8)/(tm,K));
    # that is acceptable: this block runs once per row tile and has slack.
    @pl.when(j == 0)
    def _():
        h = x_beta_ref[...]
        h = jnp.maximum(
            jnp.dot(h, param("w1"), preferred_element_type=jnp.float32) + param("b1"), 0.0)
        h = jnp.maximum(
            jnp.dot(h, param("w2"), preferred_element_type=jnp.float32) + param("b2"), 0.0)
        h = jnp.maximum(
            jnp.dot(h, param("w3"), preferred_element_type=jnp.float32) + param("b3"), 0.0)
        beta_scratch[...] = (
            jnp.dot(h, param("w4"), preferred_element_type=jnp.float32) + param("b4"))

    # --- factor network, produced directly in (K, tile_n) layout so the final GEMM
    #     needs no in-kernel transpose.
    factor_kt = (jnp.dot(param("wfT"), xfT_ref[...],
                         preferred_element_type=jnp.float32) + param("bfT"))

    beta = beta_scratch[...]
    if gemm_dtype != jnp.float32:
        # Narrower MXU operands for the final GEMM.  Operands are VMEM-resident, so
        # this saves MXU passes only - it does NOT reduce HBM traffic (out_dtype does).
        beta = beta.astype(gemm_dtype)
        factor_kt = factor_kt.astype(gemm_dtype)

    # --- out = beta @ factor.T  (rank-K contraction, f32 accumulation on the MXU)
    out_ref[...] = jnp.dot(beta, factor_kt,
                           preferred_element_type=jnp.float32).astype(out_ref.dtype)


def _vmem_bytes_estimate(tm, tn, d_beta, d_factor, k, out_bytes, slab_bytes):
    return (2 * tm * tn * out_bytes                  # double-buffered output tile
            + 2 * tm * max(d_beta, 128) * 4          # x_beta tile (lane-padded)
            + 2 * _round_up(d_factor, 8) * tn * 4    # x_factor.T tile
            + 2 * slab_bytes                         # packed parameter slab
            + tm * max(k, 128) * 4)                  # beta scratch (lane-padded)


def ca3_forward(x_beta, x_factor, packed_params, *,
                tile_m=1024, tile_n=2048,
                gemm_dtype=jnp.float32, out_dtype=jnp.bfloat16):
    """CA3 forward.  packed_params = pack_ca3_params(fold_ca3_params(raw_params)).

    out_dtype defaults to bfloat16 because the kernel is HBM-writeback-bound;
    pass jnp.float32 for exact parity with the f32 PyTorch module output.
    """
    n_beta, d_beta = x_beta.shape
    n_factor, d_factor = x_factor.shape
    slab, layout = packed_params
    k = layout["w4"][1][1]
    assert layout["w1"][1][0] == d_beta, "x_beta feature dim mismatch"
    assert layout["wfT"][1][1] == d_factor, "x_factor feature dim mismatch"

    out_bytes = jnp.dtype(out_dtype).itemsize
    slab_bytes = int(slab.size) * 4

    # Tile sizing: keep tiles (8, 128)-aligned so interior output stores are
    # unmasked and lane-dense, clamp to the (aligned) problem size, and cap the
    # live-VMEM estimate so v7x (64 MiB physical) configs never oversubscribe.
    tile_m = max(8, (int(tile_m) // 8) * 8)
    tile_n = max(128, (int(tile_n) // 128) * 128)
    tm = min(tile_m, _round_up(n_beta, 8))
    tn = min(tile_n, _round_up(n_factor, 128))
    while (_vmem_bytes_estimate(tm, tn, d_beta, d_factor, k, out_bytes, slab_bytes)
           > (44 << 20) and tn > 128):
        tn = max(128, (tn // 2) // 128 * 128)
    est = _vmem_bytes_estimate(tm, tn, d_beta, d_factor, k, out_bytes, slab_bytes)
    vmem_limit = int(min(max(est * 3 // 2, 32 << 20), 48 << 20))

    # Exact output shape: no batch padding, no padded writeback, no post-call slice.
    # Boundary blocks are ragged (OOB reads garbage / OOB writes dropped).
    grid = (pl.cdiv(n_beta, tm), pl.cdiv(n_factor, tn))

    xb = x_beta.astype(jnp.float32)
    # Transpose x_factor once in XLA (cheap: Df * N words) so the kernel RHS tile is
    # (Df, tile_n): K-major and lane-dense.
    xfT = x_factor.astype(jnp.float32).T

    cost = pl.CostEstimate(
        flops=int(2 * n_beta * n_factor * k
                  + 2 * n_beta * (d_beta * 32 + 32 * 16 + 16 * 8 + 8 * k)
                  + 2 * n_factor * d_factor * k),
        transcendentals=0,
        bytes_accessed=int(4 * (n_beta * d_beta + n_factor * d_factor)
                           + out_bytes * n_beta * n_factor + slab_bytes),
    )

    # TODO(synk): on v7x (2 TensorCores), hoist the beta MLP + factor Linear into a
    # tiny pre-pass so the main kernel becomes a pure rank-K GEMM with
    # dimension_semantics=("parallel", "parallel") over both grid axes.
    return pl.pallas_call(
        functools.partial(ca3_kernel, layout=layout, gemm_dtype=gemm_dtype),
        out_shape=jax.ShapeDtypeStruct((n_beta, n_factor), out_dtype),
        grid=grid,
        in_specs=[
            pl.BlockSpec((tm, d_beta), lambda i, j: (i, 0)),    # x_beta row tile
            pl.BlockSpec((d_factor, tn), lambda i, j: (0, j)),  # x_factor.T col tile
            pl.BlockSpec(slab.shape, lambda i, j: (0, 0)),      # packed params (resident)
        ],
        out_specs=pl.BlockSpec((tm, tn), lambda i, j: (i, j)),
        scratch_shapes=[pltpu.VMEM((tm, k), jnp.float32)],
        compiler_params=pltpu.CompilerParams(
            # i (row tiles) shards across TensorCores; j MUST stay "arbitrary":
            # the beta cache is filled at j == 0 and reused for j > 0.
            dimension_semantics=("parallel", "arbitrary"),
            vmem_limit_bytes=vmem_limit,
        ),
        cost_estimate=cost,
    )(xb, xfT, slab)


def _linear_init(key, fan_in, fan_out):
    """Deterministic PyTorch-flavoured init: U(-1/sqrt(fan_in), 1/sqrt(fan_in))."""
    kw, kb = jax.random.split(key)
    bound = 1.0 / jnp.sqrt(fan_in)
    w = jax.random.uniform(kw, (fan_in, fan_out), jnp.float32, -bound, bound)
    b = jax.random.uniform(kb, (1, fan_out), jnp.float32, -bound, bound)
    return w, b


def _bn_fold(dim, eps=1e-5):
    """Default-initialised BatchNorm1d (eval mode) as per-feature scale/shift."""
    gamma = jnp.ones((1, dim), jnp.float32)
    beta = jnp.zeros((1, dim), jnp.float32)
    rmean = jnp.zeros((1, dim), jnp.float32)
    rvar = jnp.ones((1, dim), jnp.float32)
    scale = gamma / jnp.sqrt(rvar + eps)
    shift = beta - rmean * scale
    return scale, shift


def init_ca3_params(key, input_dim_beta, output_dim_beta,
                    input_dim_factor, output_dim_factor):
    keys = jax.random.split(key, 5)
    w1, b1 = _linear_init(keys[0], input_dim_beta, 32)
    w2, b2 = _linear_init(keys[1], 32, 16)
    w3, b3 = _linear_init(keys[2], 16, 8)
    w4, b4 = _linear_init(keys[3], 8, output_dim_beta)
    wf, bf = _linear_init(keys[4], input_dim_factor, output_dim_factor)
    s1, t1 = _bn_fold(32)
    s2, t2 = _bn_fold(16)
    s3, t3 = _bn_fold(8)
    # TODO(synk): dropout layers are identity here (inference mode); training-mode
    # dropout would need pltpu.prng_* inside the kernel.
    return dict(w1=w1, b1=b1, s1=s1, t1=t1,
                w2=w2, b2=b2, s2=s2, t2=t2,
                w3=w3, b3=b3, s3=s3, t3=t3,
                w4=w4, b4=b4, wf=wf, bf=bf)


def fold_ca3_params(p):
    """Fold eval-mode BatchNorm into the preceding Linear ((xW+b)*s+t = x(Ws)+(bs+t))
    and pre-transpose the factor Linear so the kernel RHS is K-major."""
    return dict(
        w1=p["w1"] * p["s1"], b1=p["b1"] * p["s1"] + p["t1"],
        w2=p["w2"] * p["s2"], b2=p["b2"] * p["s2"] + p["t2"],
        w3=p["w3"] * p["s3"], b3=p["b3"] * p["s3"] + p["t3"],
        w4=p["w4"], b4=p["b4"],
        wfT=p["wf"].T,          # (K, Df)
        bfT=p["bf"].T,          # (K, 1)
    )


def ca3_reference(x_beta, x_factor, p):
    h = jnp.maximum((x_beta @ p["w1"] + p["b1"]) * p["s1"] + p["t1"], 0.0)
    h = jnp.maximum((h @ p["w2"] + p["b2"]) * p["s2"] + p["t2"], 0.0)
    h = jnp.maximum((h @ p["w3"] + p["b3"]) * p["s3"] + p["t3"], 0.0)
    beta = h @ p["w4"] + p["b4"]
    factor = x_factor @ p["wf"] + p["bf"]
    return beta @ factor.T


if __name__ == "__main__":
    # Small shapes implied by the module, e.g. ParamsIO(input_dim_beta=20,
    # output_dim_beta=5, input_dim_factor=10, output_dim_factor=5)
    D_BETA, D_FACTOR, K = 20, 10, 5

    key = jax.random.PRNGKey(0)
    k_xb, k_xf, k_p, k_xb2, k_xf2 = jax.random.split(key, 5)
    params = init_ca3_params(k_p, D_BETA, K, D_FACTOR, K)
    packed = pack_ca3_params(fold_ca3_params(params))

    # --- small case (single ragged tile, lane-dense 128-wide out block)
    x_beta = jax.random.normal(k_xb, (8, D_BETA), jnp.float32)
    x_factor = jax.random.normal(k_xf, (6, D_FACTOR), jnp.float32)
    ref = ca3_reference(x_beta, x_factor, params)

    out_f32 = jax.block_until_ready(
        ca3_forward(x_beta, x_factor, packed, out_dtype=jnp.float32))
    assert out_f32.shape == (8, 6)
    assert jnp.allclose(out_f32, ref, atol=1e-5, rtol=1e-5)

    out_default = jax.block_until_ready(ca3_forward(x_beta, x_factor, packed))
    assert out_default.dtype == jnp.bfloat16      # writeback-halving default
    assert jnp.allclose(out_default.astype(jnp.float32), ref, atol=2e-2, rtol=2e-2)

    # --- multi-tile case (2-D grid, ragged boundary blocks, no padding/slice copy)
    x_beta2 = jax.random.normal(k_xb2, (1030, D_BETA), jnp.float32)
    x_factor2 = jax.random.normal(k_xf2, (259, D_FACTOR), jnp.float32)
    ref2 = ca3_reference(x_beta2, x_factor2, params)

    out2 = jax.block_until_ready(
        ca3_forward(x_beta2, x_factor2, packed, out_dtype=jnp.float32))
    assert out2.shape == (1030, 259)
    assert jnp.allclose(out2, ref2, atol=1e-4, rtol=1e-4)

    # --- small explicit tiles: exercises the beta cache across several column tiles
    out3 = jax.block_until_ready(
        ca3_forward(x_beta2, x_factor2, packed, tile_m=512, tile_n=128,
                    out_dtype=jnp.float32))
    assert jnp.allclose(out3, ref2, atol=1e-4, rtol=1e-4)

    # --- default bf16 output + bf16 MXU operands for the final GEMM
    out4 = jax.block_until_ready(
        ca3_forward(x_beta2, x_factor2, packed, gemm_dtype=jnp.bfloat16))
    assert jnp.allclose(out4.astype(jnp.float32), ref2, atol=3e-2, rtol=3e-2)

    print("KERNEL_OK")
</pallas_src>

<mosaic_0001>
module attributes {stable_mosaic.version = 11 : i64} {
  func.func @ca3_kernel(%arg0: i32, %arg1: i32, %arg2: memref<8x20xf32, #tpu.memory_space<vmem>>, %arg3: memref<10x128xf32, #tpu.memory_space<vmem>>, %arg4: memref<128x128xf32, #tpu.memory_space<vmem>>, %arg5: memref<8x128xf32, #tpu.memory_space<vmem>>, %arg6: memref<8x5xf32, #tpu.memory_space<vmem>>) attributes {dimension_semantics = [#tpu.dimension_semantics<parallel>, #tpu.dimension_semantics<arbitrary>], iteration_bounds = array<i64: 1, 1>, scalar_prefetch = 0 : i64, scratch_operands = 1 : i64, tpu.core_type = #tpu.core_type<tc>, window_params = [{transform_indices = @transform_0, window_bounds = array<i64: 8, 20>}, {transform_indices = @transform_1, window_bounds = array<i64: 10, 128>}, {pipeline_mode = #tpu.pipeline_mode<synchronous>, transform_indices = @transform_2, window_bounds = array<i64: 128, 128>}, {transform_indices = @transform_3, window_bounds = array<i64: 8, 128>}]} {
    %c0_i32 = arith.constant 0 : i32
    %0 = arith.cmpi eq, %arg1, %c0_i32 : i32
    %1 = arith.extui %0 : i1 to i32
    %c0_i32_0 = arith.constant 0 : i32
    %2 = arith.cmpi ne, %1, %c0_i32_0 : i32
    scf.if %2 {
      %c0_9 = arith.constant 0 : index
      %c0_10 = arith.constant 0 : index
      %12 = vector.load %arg2[%c0_9, %c0_10] : memref<8x20xf32, #tpu.memory_space<vmem>>, vector<8x20xf32>
      %c0_11 = arith.constant 0 : index
      %c0_12 = arith.constant 0 : index
      %13 = vector.load %arg4[%c0_11, %c0_12] : memref<128x128xf32, #tpu.memory_space<vmem>>, vector<20x32xf32>
      %cst_13 = arith.constant dense<0.000000e+00> : vector<8x32xf32>
      %14 = tpu.matmul %12, %13, %cst_13 {dimension_numbers = #tpu.dot_dimension_numbers<[1], [0], [0], [1], [0, 0, 1, 1], [], []>} : vector<8x20xf32>, vector<20x32xf32>, vector<8x32xf32> -> vector<8x32xf32>
      %c88 = arith.constant 88 : index
      %c0_14 = arith.constant 0 : index
      %15 = vector.load %arg4[%c88, %c0_14] : memref<128x128xf32, #tpu.memory_space<vmem>>, vector<1x32xf32>
      %16 = vector.broadcast %15 : vector<1x32xf32> to vector<8x32xf32>
      %17 = arith.addf %14, %16 : vector<8x32xf32>
      %cst_15 = arith.constant 0.000000e+00 : f32
      %18 = vector.broadcast %cst_15 : f32 to vector<8x32xf32>
      %19 = arith.maximumf %17, %18 : vector<8x32xf32>
      %c24 = arith.constant 24 : index
      %c0_16 = arith.constant 0 : index
      %20 = vector.load %arg4[%c24, %c0_16] : memref<128x128xf32, #tpu.memory_space<vmem>>, vector<32x16xf32>
      %cst_17 = arith.constant dense<0.000000e+00> : vector<8x16xf32>
      %21 = tpu.matmul %19, %20, %cst_17 {dimension_numbers = #tpu.dot_dimension_numbers<[1], [0], [0], [1], [0, 0, 1, 1], [], []>} : vector<8x32xf32>, vector<32x16xf32>, vector<8x16xf32> -> vector<8x16xf32>
      %c96 = arith.constant 96 : index
      %c0_18 = arith.constant 0 : index
      %22 = vector.load %arg4[%c96, %c0_18] : memref<128x128xf32, #tpu.memory_space<vmem>>, vector<1x16xf32>
      %23 = vector.broadcast %22 : vector<1x16xf32> to vector<8x16xf32>
      %24 = arith.addf %21, %23 : vector<8x16xf32>
      %cst_19 = arith.constant 0.000000e+00 : f32
      %25 = vector.broadcast %cst_19 : f32 to vector<8x16xf32>
      %26 = arith.maximumf %24, %25 : vector<8x16xf32>
      %c56 = arith.constant 56 : index
      %c0_20 = arith.constant 0 : index
      %27 = vector.load %arg4[%c56, %c0_20] : memref<128x128xf32, #tpu.memory_space<vmem>>, vector<16x8xf32>
      %cst_21 = arith.constant dense<0.000000e+00> : vector<8x8xf32>
      %28 = tpu.matmul %26, %27, %cst_21 {dimension_numbers = #tpu.dot_dimension_numbers<[1], [0], [0], [1], [0, 0, 1, 1], [], []>} : vector<8x16xf32>, vector<16x8xf32>, vector<8x8xf32> -> vector<8x8xf32>
      %c104 = arith.constant 104 : index
      %c0_22 = arith.constant 0 : index
      %29 = vector.load %arg4[%c104, %c0_22] : memref<128x128xf32, #tpu.memory_space<vmem>>, vector<1x8xf32>
      %30 = vector.broadcast %29 : vector<1x8xf32> to vector<8x8xf32>
      %31 = arith.addf %28, %30 : vector<8x8xf32>
      %cst_23 = arith.constant 0.000000e+00 : f32
      %32 = vector.broadcast %cst_23 : f32 to vector<8x8xf32>
      %33 = arith.maximumf %31, %32 : vector<8x8xf32>
      %c72 = arith.constant 72 : index
      %c0_24 = arith.constant 0 : index
      %34 = vector.load %arg4[%c72, %c0_24] : memref<128x128xf32, #tpu.memory_space<vmem>>, vector<8x5xf32>
      %cst_25 = arith.constant dense<0.000000e+00> : vector<8x5xf32>
      %35 = tpu.matmul %33, %34, %cst_25 {dimension_numbers = #tpu.dot_dimension_numbers<[1], [0], [0], [1], [0, 0, 1, 1], [], []>} : vector<8x8xf32>, vector<8x5xf32>, vector<8x5xf32> -> vector<8x5xf32>
      %c112 = arith.constant 112 : index
      %c0_26 = arith.constant 0 : index
      %36 = vector.load %arg4[%c112, %c0_26] : memref<128x128xf32, #tpu.memory_space<vmem>>, vector<1x5xf32>
      %37 = vector.broadcast %36 : vector<1x5xf32> to vector<8x5xf32>
      %38 = arith.addf %35, %37 : vector<8x5xf32>
      %c0_27 = arith.constant 0 : index
      %c0_28 = arith.constant 0 : index
      %39 = vector.load %arg6[%c0_27, %c0_28] : memref<8x5xf32, #tpu.memory_space<vmem>>, vector<8x5xf32>
      tpu.vector_store %arg6[%c0_27, %c0_28], %38 {strides = array<i32>} : memref<8x5xf32, #tpu.memory_space<vmem>>, vector<8x5xf32>,
    } else {
    }
    %c80 = arith.constant 80 : index
    %c0 = arith.constant 0 : index
    %3 = vector.load %arg4[%c80, %c0] : memref<128x128xf32, #tpu.memory_space<vmem>>, vector<5x10xf32>
    %c0_1 = arith.constant 0 : index
    %c0_2 = arith.constant 0 : index
    %4 = vector.load %arg3[%c0_1, %c0_2] : memref<10x128xf32, #tpu.memory_space<vmem>>, vector<10x128xf32>
    %cst = arith.constant dense<0.000000e+00> : vector<5x128xf32>
    %5 = tpu.matmul %3, %4, %cst {dimension_numbers = #tpu.dot_dimension_numbers<[1], [0], [0], [1], [0, 0, 1, 1], [], []>} : vector<5x10xf32>, vector<10x128xf32>, vector<5x128xf32> -> vector<5x128xf32>
    %c120 = arith.constant 120 : index
    %c0_3 = arith.constant 0 : index
    %6 = vector.load %arg4[%c120, %c0_3] : memref<128x128xf32, #tpu.memory_space<vmem>>, vector<5x1xf32>
    %7 = vector.broadcast %6 : vector<5x1xf32> to vector<5x128xf32>
    %8 = arith.addf %5, %7 : vector<5x128xf32>
    %c0_4 = arith.constant 0 : index
    %c0_5 = arith.constant 0 : index
    %9 = vector.load %arg6[%c0_4, %c0_5] : memref<8x5xf32, #tpu.memory_space<vmem>>, vector<8x5xf32>
    %cst_6 = arith.constant dense<0.000000e+00> : vector<8x128xf32>
    %10 = tpu.matmul %9, %8, %cst_6 {dimension_numbers = #tpu.dot_dimension_numbers<[1], [0], [0], [1], [0, 0, 1, 1], [], []>} : vector<8x5xf32>, vector<5x128xf32>, vector<8x128xf32> -> vector<8x128xf32>
    %c0_7 = arith.constant 0 : index
    %c0_8 = arith.constant 0 : index
    %11 = vector.load %arg5[%c0_7, %c0_8] : memref<8x128xf32, #tpu.memory_space<vmem>>, vector<8x128xf32>
    tpu.vector_store %arg5[%c0_7, %c0_8], %10 {strides = array<i32>} : memref<8x128xf32, #tpu.memory_space<vmem>>, vector<8x128xf32>,
    return
  }
  func.func @transform_0(%arg0: i32, %arg1: i32) -> (i32, i32) {
    %c0_i32 = arith.constant 0 : i32
    %c0_i32_0 = arith.constant 0 : i32
    return %arg0, %c0_i32 : i32, i32
  }
  func.func @transform_1(%arg0: i32, %arg1: i32) -> (i32, i32) {
    %c0_i32 = arith.constant 0 : i32
    %c0_i32_0 = arith.constant 0 : i32
    return %c0_i32, %arg1 : i32, i32
  }
  func.func @transform_2(%arg0: i32, %arg1: i32) -> (i32, i32) {
    %c0_i32 = arith.constant 0 : i32
    %c0_i32_0 = arith.constant 0 : i32
    %c0_i32_1 = arith.constant 0 : i32
    return %c0_i32, %c0_i32_0 : i32, i32
  }
  func.func @transform_3(%arg0: i32, %arg1: i32) -> (i32, i32) {
    %c0_i32 = arith.constant 0 : i32
    return %arg0, %arg1 : i32, i32
  }
}

</mosaic_0001>

<llo_original>
// kernel: tpu_custom_call.1
$region0: #{tpu_custom_call.1}
  #allocation0 [shape = 'u32[]', space=smem, size = 0x4, offset = 0x4, fixed_abs, tag = 'smem constant byte address 0x4 - core index']
  #allocation1 [shape = 'u32[144,128]{1,0:T(1,128)}', space=vmem, size = 0x12000, scoped, tag = 'internal scratch']
  #allocation2 [shape = 'f32[8,5]{1,0:T(8,128)}', space=vmem, size = 0x1000, scoped, tag = 'scratch operand']
  %s0 = inlined_call_operand.vmem [shape: f32[8,20], index: 0, kind: input, shape index: {}]
  %s1 = inlined_call_operand.vmem [shape: f32[10,6], index: 1, kind: input, shape index: {}]
  %s2 = inlined_call_operand.hbm [shape: f32[128,128], index: 2, kind: input, shape index: {}]
  %s3 = inlined_call_operand.hbm [shape: f32[8,6], index: 3, kind: output, shape index: {}]
  %s4 = sld [smem:[#allocation0]]
  $region30: #{tpu_custom_call.1} parent=0
    _
  %s6 = ssub.s32 1, %s4
  %s7 = scalar_select 0, %s6, %s4
  $region1: #{tpu_custom_call.1} parent=0
    #allocation3 [shape = 'u8[65536]{0}', space=vmem, size = 0x10000, scoped, tag = 'input window, operand 2, single buffered']
    #allocation4 [shape = 's32[1]{0}', space=sflag, size = 0x4, scoped, tag = 'scoped memory for tpu_custom_call.1']
    #allocation5 [shape = 's32[1]{0}', space=sflag, size = 0x4, scoped, tag = 'scoped memory for tpu_custom_call.1']
    #allocation6 [shape = 'u8[4096]{0}', space=vmem, size = 0x1000, scoped, tag = 'output window, operand 0, single buffered']
    %8 = vsyncpa [#allocation4], 0
    %9 = vsyncpa [#allocation5], 0
    // Predicated region
    $region2: #{tpu_custom_call.1} parent=1 // pred_check
      _
    $region3: #{tpu_custom_call.1} parent=1 // pred_check_branch
      %11 = sbr.rel (0) target = $region5
    $region4: #{tpu_custom_call.1} parent=1 // pred_region
      _
    $region5: #{tpu_custom_call.1} parent=1 // pred_fallthru
      _
    // Predicated region
    $region6: #{tpu_custom_call.1} parent=1 // pred_check
      _
    $region7: #{tpu_custom_call.1} parent=1 // pred_check_branch
      %13 = sbr.rel (0) target = $region9
    $region8: #{tpu_custom_call.1} parent=1 // pred_region
      _
    $region9: #{tpu_custom_call.1} parent=1 // pred_fallthru
      _
    // Predicated region
    $region10: #{tpu_custom_call.1} parent=1 // pred_check
      _
    $region11: #{tpu_custom_call.1} parent=1 // pred_check_branch
      %15 = sbr.rel (0) target = $region13
    $region12: #{tpu_custom_call.1} parent=1 // pred_region
      %s17 = ssub.s32 2048, 2048
      %18 = vsyncadd [#allocation4], %s17
      %s19 = sshll.u32 [#allocation3], 4
      %s20 = int_to_ptr.vmem [resolvable:$true] %s19
      %25 = dma.hbm_to_vmem [thread:$0]  %s2, 2048, %s20, [#allocation4], 128, 128, 8
    $region13: #{tpu_custom_call.1} parent=1 // pred_fallthru
      _
    // Predicated region
    $region14: #{tpu_custom_call.1} parent=1 // pred_check
      _
    $region15: #{tpu_custom_call.1} parent=1 // pred_check_branch
      %27 = sbr.rel (0) target = $region17
    $region16: #{tpu_custom_call.1} parent=1 // pred_region
      %28 = dma.done [#allocation4], 2048
    $region17: #{tpu_custom_call.1} parent=1 // pred_fallthru
      _
    %p29 = scmp.eq.s32.totalorder 0, 0
    // Predicated region
    $region18: #{tpu_custom_call.1} parent=1 // pred_check
      %p30 = pneg %p29
    $region19: #{tpu_custom_call.1} parent=1 // pred_check_branch
      %32 = sbr.rel (%p30) target = $region21
    $region20: #{tpu_custom_call.1} parent=1 // pred_region
      %v33 = vld [vmem:[%s0] sm:$0xff]
      %v34 = vld [vmem:[#allocation3] sm:$0xff]
      %v35 = vld [vmem:[#allocation3 + $0x8] sm:$0xff]
      %v36 = vld [vmem:[#allocation3 + $0x10] sm:$0xf]
      %v37 = vld [vmem:[#allocation3 + $0x58] sm:$0x1]
      %v38 = vlaneseq
      %v39 = vshrl.u32 %v38, 7
      %v40 = vsub.s32 0, %v39
      %v41 = vrot.slane %v37, %v40
      %vm42 = vcmask 162816
      %v44 = vsel %vm42, %v33, 0
      %vm46 = vcmask 1043456
      %v48 = vsel %vm46, %v36, 0
      %50 = vmatprep.subr.mxu0 0.0
      %51 = vmatpush1.msra.mxu0 0.0
      %52 = vmatprep.subr.mxu0 0.0
      %53 = vmatpush1.msra.mxu0 0.0
      %54 = vmatprep.subr.mxu0 0.0
      %55 = vmatpush1.msra.mxu0 0.0
      %56 = vmatprep.subr.mxu0 0.0
      %57 = vmatpush1.msra.mxu0 0.0
      %58 = vmatprep.subr.mxu0 0.0
      %59 = vmatpush1.msra.mxu0 0.0
      %60 = vmatprep.subr.mxu0 0.0
      %61 = vmatpush1.msra.mxu0 0.0
      %62 = vmatprep.subr.mxu0 0.0
      %63 = vmatpush1.msra.mxu0 0.0
      %64 = vmatprep.subr.mxu0 0.0
      %65 = vmatpush1.msra.mxu0 0.0
      %66 = vmatprep.subr.mxu0 0.0
      %67 = vmatpush1.msra.mxu0 0.0
      %68 = vmatprep.subr.mxu0 0.0
      %69 = vmatpush1.msra.mxu0 0.0
      %70 = vmatprep.subr.mxu0 0.0
      %71 = vmatpush1.msra.mxu0 0.0
      %72 = vmatprep.subr.mxu0 0.0
      %73 = vmatpush1.msra.mxu0 0.0
      %74 = vmatprep.subr.mxu0 0.0
      %75 = vmatpush1.msra.mxu0 0.0
      %76 = vmatprep.subr.mxu0 0.0
      %77 = vmatpush1.msra.mxu0 %v48
      %78 = vmatprep.subr.mxu0 0.0
      %79 = vmatpush1.msra.mxu0 %v35
      %80 = vmatprep.subr.mxu0 0.0
      %81 = vmatpush1.msra.mxu0 %v34
      %82 = vmatprep.subr.mxu0 0.0
      %83 = vmatpush2.msra.mxu0 0.0
      %84 = vmatprep.subr.mxu0 0.0
      %85 = vmatpush2.msra.mxu0 0.0
      %86 = vmatprep.subr.mxu0 0.0
      %87 = vmatpush2.msra.mxu0 0.0
      %88 = vmatprep.subr.mxu0 0.0
      %89 = vmatpush2.msra.mxu0 0.0
      %90 = vmatprep.subr.mxu0 0.0
      %91 = vmatpush2.msra.mxu0 0.0
      %92 = vmatprep.subr.mxu0 0.0
      %93 = vmatpush2.msra.mxu0 0.0
      %94 = vmatprep.subr.mxu0 0.0
      %95 = vmatpush2.msra.mxu0 0.0
      %96 = vmatprep.subr.mxu0 0.0
      %97 = vmatpush2.msra.mxu0 0.0
      %98 = vmatprep.subr.mxu0 0.0
      %99 = vmatpush2.msra.mxu0 0.0
      %100 = vmatprep.subr.mxu0 0.0
      %101 = vmatpush2.msra.mxu0 0.0
      %102 = vmatprep.subr.mxu0 0.0
      %103 = vmatpush2.msra.mxu0 0.0
      %104 = vmatprep.subr.mxu0 0.0
      %105 = vmatpush2.msra.mxu0 0.0
      %106 = vmatprep.subr.mxu0 0.0
      %107 = vmatpush2.msra.mxu0 0.0
      %108 = vmatprep.subr.mxu0 0.0
      %109 = vmatpush2.msra.mxu0 0.0
      %110 = vmatprep.subr.mxu0 0.0
      %111 = vmatpush2.msra.mxu0 0.0
      %112 = vmatprep.subr.mxu0 0.0
      %113 = vmatpush2.msra.mxu0 0.0
      %114 = vmatprep.mubr.f32.mxu0 0.0
      %115 = vmatmul.mubr.f32.gmra.mxu0 %v44
      %v116 = vpop.f32.mrf.mxu0
      %v117 = vadd.f32 %v41, %v116
      %v118 = vpop.f32.mrf.mxu0
      %119 = vdwg.mxu0
      %v120 = vmax.f32 %v117, 0.0
      %v121 = vld [vmem:[#allocation3 + $0x18] sm:$0xff]
      %v122 = vld [vmem:[#allocation3 + $0x20] sm:$0xff]
      %v123 = vld [vmem:[#allocation3 + $0x28] sm:$0xff]
      %v124 = vld [vmem:[#allocation3 + $0x30] sm:$0xff]
      %v125 = vld [vmem:[#allocation3 + $0x60] sm:$0x1]
      %v126 = vlaneseq
      %v127 = vshrl.u32 %v126, 7
      %v128 = vsub.s32 0, %v127
      %v129 = vrot.slane %v125, %v128
      %vm130 = vcmask 261120
      %v132 = vsel %vm130, %v120, 0
      %134 = vmatprep.subr.mxu0 0.0
      %135 = vmatpush1.msra.mxu0 0.0
      %136 = vmatprep.subr.mxu0 0.0
      %137 = vmatpush1.msra.mxu0 0.0
      %138 = vmatprep.subr.mxu0 0.0
      %139 = vmatpush1.msra.mxu0 0.0
      %140 = vmatprep.subr.mxu0 0.0
      %141 = vmatpush1.msra.mxu0 0.0
      %142 = vmatprep.subr.mxu0 0.0
      %143 = vmatpush1.msra.mxu0 0.0
      %144 = vmatprep.subr.mxu0 0.0
      %145 = vmatpush1.msra.mxu0 0.0
      %146 = vmatprep.subr.mxu0 0.0
      %147 = vmatpush1.msra.mxu0 0.0
      %148 = vmatprep.subr.mxu0 0.0
      %149 = vmatpush1.msra.mxu0 0.0
      %150 = vmatprep.subr.mxu0 0.0
      %151 = vmatpush1.msra.mxu0 0.0
      %152 = vmatprep.subr.mxu0 0.0
      %153 = vmatpush1.msra.mxu0 0.0
      %154 = vmatprep.subr.mxu0 0.0
      %155 = vmatpush1.msra.mxu0 0.0
      %156 = vmatprep.subr.mxu0 0.0
      %157 = vmatpush1.msra.mxu0 0.0
      %158 = vmatprep.subr.mxu0 0.0
      %159 = vmatpush1.msra.mxu0 %v124
      %160 = vmatprep.subr.mxu0 0.0
      %161 = vmatpush1.msra.mxu0 %v123
      %162 = vmatprep.subr.mxu0 0.0
      %163 = vmatpush1.msra.mxu0 %v122
      %164 = vmatprep.subr.mxu0 0.0
      %165 = vmatpush1.msra.mxu0 %v121
      %166 = vmatprep.subr.mxu0 0.0
      %167 = vmatpush2.msra.mxu0 0.0
      %168 = vmatprep.subr.mxu0 0.0
      %169 = vmatpush2.msra.mxu0 0.0
      %170 = vmatprep.subr.mxu0 0.0
      %171 = vmatpush2.msra.mxu0 0.0
      %172 = vmatprep.subr.mxu0 0.0
      %173 = vmatpush2.msra.mxu0 0.0
      %174 = vmatprep.subr.mxu0 0.0
      %175 = vmatpush2.msra.mxu0 0.0
      %176 = vmatprep.subr.mxu0 0.0
      %177 = vmatpush2.msra.mxu0 0.0
      %178 = vmatprep.subr.mxu0 0.0
      %179 = vmatpush2.msra.mxu0 0.0
      %180 = vmatprep.subr.mxu0 0.0
      %181 = vmatpush2.msra.mxu0 0.0
      %182 = vmatprep.subr.mxu0 0.0
      %183 = vmatpush2.msra.mxu0 0.0
      %184 = vmatprep.subr.mxu0 0.0
      %185 = vmatpush2.msra.mxu0 0.0
      %186 = vmatprep.subr.mxu0 0.0
      %187 = vmatpush2.msra.mxu0 0.0
      %188 = vmatprep.subr.mxu0 0.0
      %189 = vmatpush2.msra.mxu0 0.0
      %190 = vmatprep.subr.mxu0 0.0
      %191 = vmatpush2.msra.mxu0 0.0
      %192 = vmatprep.subr.mxu0 0.0
      %193 = vmatpush2.msra.mxu0 0.0
      %194 = vmatprep.subr.mxu0 0.0
      %195 = vmatpush2.msra.mxu0 0.0
      %196 = vmatprep.subr.mxu0 0.0
      %197 = vmatpush2.msra.mxu0 0.0
      %198 = vmatprep.mubr.f32.mxu0 0.0
      %199 = vmatmul.mubr.f32.gmra.mxu0 %v132
      %v200 = vpop.f32.mrf.mxu0
      %v201 = vadd.f32 %v129, %v200
      %v202 = vpop.f32.mrf.mxu0
      %203 = vdwg.mxu0
      %v204 = vmax.f32 %v201, 0.0
      %v205 = vld [vmem:[#allocation3 + $0x38] sm:$0xff]
      %v206 = vld [vmem:[#allocation3 + $0x40] sm:$0xff]
      %v207 = vld [vmem:[#allocation3 + $0x68] sm:$0x1]
      %v208 = vlaneseq
      %v209 = vshrl.u32 %v208, 7
      %v210 = vsub.s32 0, %v209
      %v211 = vrot.slane %v207, %v210
      %vm212 = vcmask 130048
      %v214 = vsel %vm212, %v204, 0
      %216 = vmatprep.subr.mxu0 0.0
      %217 = vmatpush1.msra.mxu0 0.0
      %218 = vmatprep.subr.mxu0 0.0
      %219 = vmatpush1.msra.mxu0 0.0
      %220 = vmatprep.subr.mxu0 0.0
      %221 = vmatpush1.msra.mxu0 0.0
      %222 = vmatprep.subr.mxu0 0.0
      %223 = vmatpush1.msra.mxu0 0.0
      %224 = vmatprep.subr.mxu0 0.0
      %225 = vmatpush1.msra.mxu0 0.0
      %226 = vmatprep.subr.mxu0 0.0
      %227 = vmatpush1.msra.mxu0 0.0
      %228 = vmatprep.subr.mxu0 0.0
      %229 = vmatpush1.msra.mxu0 0.0
      %230 = vmatprep.subr.mxu0 0.0
      %231 = vmatpush1.msra.mxu0 0.0
      %232 = vmatprep.subr.mxu0 0.0
      %233 = vmatpush1.msra.mxu0 0.0
      %234 = vmatprep.subr.mxu0 0.0
      %235 = vmatpush1.msra.mxu0 0.0
      %236 = vmatprep.subr.mxu0 0.0
      %237 = vmatpush1.msra.mxu0 0.0
      %238 = vmatprep.subr.mxu0 0.0
      %239 = vmatpush1.msra.mxu0 0.0
      %240 = vmatprep.subr.mxu0 0.0
      %241 = vmatpush1.msra.mxu0 0.0
      %242 = vmatprep.subr.mxu0 0.0
      %243 = vmatpush1.msra.mxu0 0.0
      %244 = vmatprep.subr.mxu0 0.0
      %245 = vmatpush1.msra.mxu0 %v206
      %246 = vmatprep.subr.mxu0 0.0
      %247 = vmatpush1.msra.mxu0 %v205
      %248 = vmatprep.subr.mxu0 0.0
      %249 = vmatpush2.msra.mxu0 0.0
      %250 = vmatprep.subr.mxu0 0.0
      %251 = vmatpush2.msra.mxu0 0.0
      %252 = vmatprep.subr.mxu0 0.0
      %253 = vmatpush2.msra.mxu0 0.0
      %254 = vmatprep.subr.mxu0 0.0
      %255 = vmatpush2.msra.mxu0 0.0
      %256 = vmatprep.subr.mxu0 0.0
      %257 = vmatpush2.msra.mxu0 0.0
      %258 = vmatprep.subr.mxu0 0.0
      %259 = vmatpush2.msra.mxu0 0.0
      %260 = vmatprep.subr.mxu0 0.0
      %261 = vmatpush2.msra.mxu0 0.0
      %262 = vmatprep.subr.mxu0 0.0
      %263 = vmatpush2.msra.mxu0 0.0
      %264 = vmatprep.subr.mxu0 0.0
      %265 = vmatpush2.msra.mxu0 0.0
      %266 = vmatprep.subr.mxu0 0.0
      %267 = vmatpush2.msra.mxu0 0.0
      %268 = vmatprep.subr.mxu0 0.0
      %269 = vmatpush2.msra.mxu0 0.0
      %270 = vmatprep.subr.mxu0 0.0
      %271 = vmatpush2.msra.mxu0 0.0
      %272 = vmatprep.subr.mxu0 0.0
      %273 = vmatpush2.msra.mxu0 0.0
      %274 = vmatprep.subr.mxu0 0.0
      %275 = vmatpush2.msra.mxu0 0.0
      %276 = vmatprep.subr.mxu0 0.0
      %277 = vmatpush2.msra.mxu0 0.0
      %278 = vmatprep.subr.mxu0 0.0
      %279 = vmatpush2.msra.mxu0 0.0
      %280 = vmatprep.mubr.f32.mxu0 0.0
      %281 = vmatmul.mubr.f32.gmra.mxu0 %v214
      %v282 = vpop.f32.mrf.mxu0
      %v283 = vadd.f32 %v211, %v282
      %v284 = vpop.f32.mrf.mxu0
      %285 = vdwg.mxu0
      %v286 = vmax.f32 %v283, 0.0
      %v287 = vld [vmem:[#allocation3 + $0x48] sm:$0xff]
      %v288 = vld [vmem:[#allocation3 + $0x70] sm:$0x1]
      %v289 = vlaneseq
      %v290 = vshrl.u32 %v289, 7
      %v291 = vsub.s32 0, %v290
      %v292 = vrot.slane %v288, %v291
      %vm293 = vcmask 64512
      %v295 = vsel %vm293, %v286, 0
      %297 = vmatprep.subr.mxu0 0.0
      %298 = vmatpush1.msra.mxu0 0.0
      %299 = vmatprep.subr.mxu0 0.0
      %300 = vmatpush1.msra.mxu0 0.0
      %301 = vmatprep.subr.mxu0 0.0
      %302 = vmatpush1.msra.mxu0 0.0
      %303 = vmatprep.subr.mxu0 0.0
      %304 = vmatpush1.msra.mxu0 0.0
      %305 = vmatprep.subr.mxu0 0.0
      %306 = vmatpush1.msra.mxu0 0.0
      %307 = vmatprep.subr.mxu0 0.0
      %308 = vmatpush1.msra.mxu0 0.0
      %309 = vmatprep.subr.mxu0 0.0
      %310 = vmatpush1.msra.mxu0 0.0
      %311 = vmatprep.subr.mxu0 0.0
      %312 = vmatpush1.msra.mxu0 0.0
      %313 = vmatprep.subr.mxu0 0.0
      %314 = vmatpush1.msra.mxu0 0.0
      %315 = vmatprep.subr.mxu0 0.0
      %316 = vmatpush1.msra.mxu0 0.0
      %317 = vmatprep.subr.mxu0 0.0
      %318 = vmatpush1.msra.mxu0 0.0
      %319 = vmatprep.subr.mxu0 0.0
      %320 = vmatpush1.msra.mxu0 0.0
      %321 = vmatprep.subr.mxu0 0.0
      %322 = vmatpush1.msra.mxu0 0.0
      %323 = vmatprep.subr.mxu0 0.0
      %324 = vmatpush1.msra.mxu0 0.0
      %325 = vmatprep.subr.mxu0 0.0
      %326 = vmatpush1.msra.mxu0 0.0
      %327 = vmatprep.subr.mxu0 0.0
      %328 = vmatpush1.msra.mxu0 %v287
      %329 = vmatprep.subr.mxu0 0.0
      %330 = vmatpush2.msra.mxu0 0.0
      %331 = vmatprep.subr.mxu0 0.0
      %332 = vmatpush2.msra.mxu0 0.0
      %333 = vmatprep.subr.mxu0 0.0
      %334 = vmatpush2.msra.mxu0 0.0
      %335 = vmatprep.subr.mxu0 0.0
      %336 = vmatpush2.msra.mxu0 0.0
      %337 = vmatprep.subr.mxu0 0.0
      %338 = vmatpush2.msra.mxu0 0.0
      %339 = vmatprep.subr.mxu0 0.0
      %340 = vmatpush2.msra.mxu0 0.0
      %341 = vmatprep.subr.mxu0 0.0
      %342 = vmatpush2.msra.mxu0 0.0
      %343 = vmatprep.subr.mxu0 0.0
      %344 = vmatpush2.msra.mxu0 0.0
      %345 = vmatprep.subr.mxu0 0.0
      %346 = vmatpush2.msra.mxu0 0.0
      %347 = vmatprep.subr.mxu0 0.0
      %348 = vmatpush2.msra.mxu0 0.0
      %349 = vmatprep.subr.mxu0 0.0
      %350 = vmatpush2.msra.mxu0 0.0
      %351 = vmatprep.subr.mxu0 0.0
      %352 = vmatpush2.msra.mxu0 0.0
      %353 = vmatprep.subr.mxu0 0.0
      %354 = vmatpush2.msra.mxu0 0.0
      %355 = vmatprep.subr.mxu0 0.0
      %356 = vmatpush2.msra.mxu0 0.0
      %357 = vmatprep.subr.mxu0 0.0
      %358 = vmatpush2.msra.mxu0 0.0
      %359 = vmatprep.subr.mxu0 0.0
      %360 = vmatpush2.msra.mxu0 0.0
      %361 = vmatprep.mubr.f32.mxu0 0.0
      %362 = vmatmul.mubr.f32.gmra.mxu0 %v295
      %v363 = vpop.f32.mrf.mxu0
      %v364 = vadd.f32 %v292, %v363
      %v365 = vpop.f32.mrf.mxu0
      %366 = vdwg.mxu0
      %vm367 = vcmask 39936
      %368 = vst.msk [vmem:[#allocation2] sm:$0xff] %vm367, %v364
    $region21: #{tpu_custom_call.1} parent=1 // pred_fallthru
      _
    %v369 = vld [vmem:[#allocation3 + $0x50] sm:$0x1f]
    %v370 = vld [vmem:[%s1] sm:$0xff]
    %v371 = vld [vmem:[%s1 + $0x8] sm:$0x3]
    %v372 = vld [vmem:[#allocation3 + $0x78] sm:$0x1f]
    %374 = vset.pattern.permute.xlu0 0
    %375 = vperm.xlu0 %374, %v372
    %v376 = vpop.permute.xlu0 %375
    %vm378 = vcmask 80896
    %v380 = vsel %vm378, %v369, 0
    %vm382 = vcmask 1041408
    %v384 = vsel %vm382, %v371, 0
    %386 = vmatprep.subr.mxu0 0.0
    %387 = vmatpush1.msra.mxu0 0.0
    %388 = vmatprep.subr.mxu0 0.0
    %389 = vmatpush1.msra.mxu0 0.0
    %390 = vmatprep.subr.mxu0 0.0
    %391 = vmatpush1.msra.mxu0 0.0
    %392 = vmatprep.subr.mxu0 0.0
    %393 = vmatpush1.msra.mxu0 0.0
    %394 = vmatprep.subr.mxu0 0.0
    %395 = vmatpush1.msra.mxu0 0.0
    %396 = vmatprep.subr.mxu0 0.0
    %397 = vmatpush1.msra.mxu0 0.0
    %398 = vmatprep.subr.mxu0 0.0
    %399 = vmatpush1.msra.mxu0 0.0
    %400 = vmatprep.subr.mxu0 0.0
    %401 = vmatpush1.msra.mxu0 0.0
    %402 = vmatprep.subr.mxu0 0.0
    %403 = vmatpush1.msra.mxu0 0.0
    %404 = vmatprep.subr.mxu0 0.0
    %405 = vmatpush1.msra.mxu0 0.0
    %406 = vmatprep.subr.mxu0 0.0
    %407 = vmatpush1.msra.mxu0 0.0
    %408 = vmatprep.subr.mxu0 0.0
    %409 = vmatpush1.msra.mxu0 0.0
    %410 = vmatprep.subr.mxu0 0.0
    %411 = vmatpush1.msra.mxu0 0.0
    %412 = vmatprep.subr.mxu0 0.0
    %413 = vmatpush1.msra.mxu0 0.0
    %414 = vmatprep.subr.mxu0 0.0
    %415 = vmatpush1.msra.mxu0 %v384
    %416 = vmatprep.subr.mxu0 0.0
    %417 = vmatpush1.msra.mxu0 %v370
    %418 = vmatprep.subr.mxu0 0.0
    %419 = vmatpush2.msra.mxu0 0.0
    %420 = vmatprep.subr.mxu0 0.0
    %421 = vmatpush2.msra.mxu0 0.0
    %422 = vmatprep.subr.mxu0 0.0
    %423 = vmatpush2.msra.mxu0 0.0
    %424 = vmatprep.subr.mxu0 0.0
    %425 = vmatpush2.msra.mxu0 0.0
    %426 = vmatprep.subr.mxu0 0.0
    %427 = vmatpush2.msra.mxu0 0.0
    %428 = vmatprep.subr.mxu0 0.0
    %429 = vmatpush2.msra.mxu0 0.0
    %430 = vmatprep.subr.mxu0 0.0
    %431 = vmatpush2.msra.mxu0 0.0
    %432 = vmatprep.subr.mxu0 0.0
    %433 = vmatpush2.msra.mxu0 0.0
    %434 = vmatprep.subr.mxu0 0.0
    %435 = vmatpush2.msra.mxu0 0.0
    %436 = vmatprep.subr.mxu0 0.0
    %437 = vmatpush2.msra.mxu0 0.0
    %438 = vmatprep.subr.mxu0 0.0
    %439 = vmatpush2.msra.mxu0 0.0
    %440 = vmatprep.subr.mxu0 0.0
    %441 = vmatpush2.msra.mxu0 0.0
    %442 = vmatprep.subr.mxu0 0.0
    %443 = vmatpush2.msra.mxu0 0.0
    %444 = vmatprep.subr.mxu0 0.0
    %445 = vmatpush2.msra.mxu0 0.0
    %446 = vmatprep.subr.mxu0 0.0
    %447 = vmatpush2.msra.mxu0 0.0
    %448 = vmatprep.subr.mxu0 0.0
    %449 = vmatpush2.msra.mxu0 0.0
    %450 = vmatprep.mubr.f32.mxu0 0.0
    %451 = vmatmul.mubr.f32.gmra.mxu0 %v380
    %v452 = vpop.f32.mrf.mxu0
    %v453 = vadd.f32 %v376, %v452
    %v454 = vpop.f32.mrf.mxu0
    %455 = vdwg.mxu0
    %v456 = vld [vmem:[#allocation2] sm:$0xff]
    %vm457 = vcmask 39936
    %v459 = vsel %vm457, %v456, 0
    %vm461 = vcmask 1044480
    %v463 = vsel %vm461, %v453, 0
    %465 = vmatprep.subr.mxu0 0.0
    %466 = vmatpush1.msra.mxu0 0.0
    %467 = vmatprep.subr.mxu0 0.0
    %468 = vmatpush1.msra.mxu0 0.0
    %469 = vmatprep.subr.mxu0 0.0
    %470 = vmatpush1.msra.mxu0 0.0
    %471 = vmatprep.subr.mxu0 0.0
    %472 = vmatpush1.msra.mxu0 0.0
    %473 = vmatprep.subr.mxu0 0.0
    %474 = vmatpush1.msra.mxu0 0.0
    %475 = vmatprep.subr.mxu0 0.0
    %476 = vmatpush1.msra.mxu0 0.0
    %477 = vmatprep.subr.mxu0 0.0
    %478 = vmatpush1.msra.mxu0 0.0
    %479 = vmatprep.subr.mxu0 0.0
    %480 = vmatpush1.msra.mxu0 0.0
    %481 = vmatprep.subr.mxu0 0.0
    %482 = vmatpush1.msra.mxu0 0.0
    %483 = vmatprep.subr.mxu0 0.0
    %484 = vmatpush1.msra.mxu0 0.0
    %485 = vmatprep.subr.mxu0 0.0
    %486 = vmatpush1.msra.mxu0 0.0
    %487 = vmatprep.subr.mxu0 0.0
    %488 = vmatpush1.msra.mxu0 0.0
    %489 = vmatprep.subr.mxu0 0.0
    %490 = vmatpush1.msra.mxu0 0.0
    %491 = vmatprep.subr.mxu0 0.0
    %492 = vmatpush1.msra.mxu0 0.0
    %493 = vmatprep.subr.mxu0 0.0
    %494 = vmatpush1.msra.mxu0 0.0
    %495 = vmatprep.subr.mxu0 0.0
    %496 = vmatpush1.msra.mxu0 %v463
    %497 = vmatprep.subr.mxu0 0.0
    %498 = vmatpush2.msra.mxu0 0.0
    %499 = vmatprep.subr.mxu0 0.0
    %500 = vmatpush2.msra.mxu0 0.0
    %501 = vmatprep.subr.mxu0 0.0
    %502 = vmatpush2.msra.mxu0 0.0
    %503 = vmatprep.subr.mxu0 0.0
    %504 = vmatpush2.msra.mxu0 0.0
    %505 = vmatprep.subr.mxu0 0.0
    %506 = vmatpush2.msra.mxu0 0.0
    %507 = vmatprep.subr.mxu0 0.0
    %508 = vmatpush2.msra.mxu0 0.0
    %509 = vmatprep.subr.mxu0 0.0
    %510 = vmatpush2.msra.mxu0 0.0
    %511 = vmatprep.subr.mxu0 0.0
    %512 = vmatpush2.msra.mxu0 0.0
    %513 = vmatprep.subr.mxu0 0.0
    %514 = vmatpush2.msra.mxu0 0.0
    %515 = vmatprep.subr.mxu0 0.0
    %516 = vmatpush2.msra.mxu0 0.0
    %517 = vmatprep.subr.mxu0 0.0
    %518 = vmatpush2.msra.mxu0 0.0
    %519 = vmatprep.subr.mxu0 0.0
    %520 = vmatpush2.msra.mxu0 0.0
    %521 = vmatprep.subr.mxu0 0.0
    %522 = vmatpush2.msra.mxu0 0.0
    %523 = vmatprep.subr.mxu0 0.0
    %524 = vmatpush2.msra.mxu0 0.0
    %525 = vmatprep.subr.mxu0 0.0
    %526 = vmatpush2.msra.mxu0 0.0
    %527 = vmatprep.subr.mxu0 0.0
    %528 = vmatpush2.msra.mxu0 0.0
    %529 = vmatprep.mubr.f32.mxu0 0.0
    %530 = vmatmul.mubr.f32.gmra.mxu0 %v459
    %v531 = vpop.f32.mrf.mxu0
    %v532 = vadd.f32 0.0, %v531
    %v533 = vpop.f32.mrf.mxu0
    %534 = vdwg.mxu0
    %535 = vst [vmem:[#allocation6] sm:$0xff] %v532
    // Predicated region
    $region22: #{tpu_custom_call.1} parent=1 // pred_check
      _
    $region23: #{tpu_custom_call.1} parent=1 // pred_check_branch
      %537 = sbr.rel (0) target = $region25
    $region24: #{tpu_custom_call.1} parent=1 // pred_region
      %s539 = ssub.s32 128, 128
      %540 = vsyncadd [#allocation5], %s539
      %s542 = sshll.u32 [#allocation6], 4
      %s543 = int_to_ptr.vmem [resolvable:$true] %s542
      %545 = dma.vmem_to_hbm [thread:$0]  %s543, 128, %s3, [#allocation5]
    $region25: #{tpu_custom_call.1} parent=1 // pred_fallthru
      _
    // Predicated region
    $region26: #{tpu_custom_call.1} parent=1 // pred_check
      _
    $region27: #{tpu_custom_call.1} parent=1 // pred_check_branch
      %547 = sbr.rel (0) target = $region29
    $region28: #{tpu_custom_call.1} parent=1 // pred_region
      %548 = dma.done [#allocation5], 128
    $region29: #{tpu_custom_call.1} parent=1 // pred_fallthru
      _
    %549 = vsyncpa [#allocation4], 1
    %550 = vsyncpa [#allocation5], 1

</llo_original>
